<compile_context>
chip_gen: v7x
topology: tpu7x:2x2x1
jax: 0.10.0
libtpu: 0.0.40
codegen_flags: <defaults>
</compile_context>

<pallas_src>
import functools

import jax
import jax.numpy as jnp
from jax.experimental import pallas as pl
from jax.experimental.pallas import tpu as pltpu

TAU = 0.2          # tau_tropical, learn_tau_tropical=False -> compile-time const
BN_EPS = 1e-5      # nn.BatchNorm1d default eps


def _round_up(x, m):
    return (x + m - 1) // m * m


# ----------------------------------------------------------------------------
# Pallas kernel: aggregator + MLP + output head for one batch tile.
# All activations are (features, TB) with the batch tile on the lane axis.
# ----------------------------------------------------------------------------
def _net_kernel(x_ref, p_ref, out_ref, *, seq_len, d, h1, h2, out_pad, offs, tau):
    inv_tau = 1.0 / tau

    # --- tropical soft-max / soft-min over the set axis (stabilized) -------
    # x block is (S, D, TB): lane-dense vregs, reduction over S is a plain
    # VPU accumulation over the leading axis (no cross-lane XLU work).
    x0 = x_ref[0]
    xmax = x0
    xmin = x0
    # S is small -> full static unroll.
    # TODO(synk): switch to lax.fori_loop(..., unroll=4) if seq_len gets large.
    for s in range(1, seq_len):
        xs = x_ref[s]
        xmax = jnp.maximum(xmax, xs)
        xmin = jnp.minimum(xmin, xs)

    sum_p = jnp.zeros_like(xmax)
    sum_n = jnp.zeros_like(xmax)
    for s in range(seq_len):
        xs = x_ref[s]
        sum_p = sum_p + jnp.exp((xs - xmax) * inv_tau)   # exponents <= 0
        sum_n = sum_n + jnp.exp((xmin - xs) * inv_tau)   # exponents <= 0
    soft_max = xmax + tau * jnp.log(sum_p)               # (D, TB)
    soft_min = xmin - tau * jnp.log(sum_n)               # (D, TB)
    diff = soft_max - soft_min

    # --- learned sigmoid gate over the difference ---------------------------
    wg = p_ref[offs["wg"]:offs["wg"] + d, 0:d]
    bg = p_ref[offs["bg"]:offs["bg"] + d, 0:1]
    gate = jax.nn.sigmoid(
        jnp.dot(wg, diff, preferred_element_type=jnp.float32) + bg)
    gated = gate * soft_max + (1.0 - gate) * soft_min    # (D, TB)

    # --- MLP layer 1: W1 split into gated/diff halves (no concat scratch) ---
    w1g = p_ref[offs["w1g"]:offs["w1g"] + h1, 0:d]
    w1d = p_ref[offs["w1d"]:offs["w1d"] + h1, 0:d]
    b1 = p_ref[offs["b1"]:offs["b1"] + h1, 0:1]
    h = jnp.maximum(
        jnp.dot(w1g, gated, preferred_element_type=jnp.float32)
        + jnp.dot(w1d, diff, preferred_element_type=jnp.float32)
        + b1, 0.0)                                       # (H1, TB)

    # --- MLP layer 2 (BatchNorm1 folded in on the host) ----------------------
    w2 = p_ref[offs["w2"]:offs["w2"] + h2, 0:h1]
    b2 = p_ref[offs["b2"]:offs["b2"] + h2, 0:1]
    h = jnp.maximum(
        jnp.dot(w2, h, preferred_element_type=jnp.float32) + b2, 0.0)  # (H2, TB)

    # --- output head (BatchNorm2 folded in; rows zero-padded to sublane mult)
    w3 = p_ref[offs["w3"]:offs["w3"] + out_pad, 0:h2]
    b3 = p_ref[offs["b3"]:offs["b3"] + out_pad, 0:1]
    out_ref[...] = (jnp.dot(w3, h, preferred_element_type=jnp.float32)
                    + b3).astype(out_ref.dtype)          # (OUT_PAD, TB)


# ----------------------------------------------------------------------------
# Host-side helpers: param slab packing, core count, wrapper.
# ----------------------------------------------------------------------------
def _num_tensorcores_per_chip():
    # v7x (and v4 megacore) expose 2 TensorCores to a single Pallas call;
    # v5e / v6e are single-TensorCore chips.
    try:
        kind = jax.devices()[0].device_kind.lower()
    except Exception:
        return 1
    return 2 if ("v7" in kind or "v4" in kind) else 1


def _build_param_slab(blocks):
    """Stack small 2-D f32 params into one lane-padded slab.

    Each block starts at a sublane-aligned (multiple-of-8) row offset and at
    column 0; the slab lane width is padded to a multiple of 128.  Returns
    (slab, {name: row_offset}).  Collapses 9 tiny parameter DMAs into 1.
    """
    width = _round_up(max(a.shape[1] for _, a in blocks), 128)
    offs, rows, r = {}, [], 0
    for name, arr in blocks:
        offs[name] = r
        hgt, wid = arr.shape
        h_pad = _round_up(hgt, 8)
        rows.append(jnp.pad(arr.astype(jnp.float32),
                            ((0, h_pad - hgt), (0, width - wid))))
        r += h_pad
    return jnp.concatenate(rows, axis=0), offs


def gated_tropical_difference_net(x, params, *, max_block_b=512):
    B, S, D = x.shape
    H1 = params["w1"].shape[1]
    H2 = params["w2"].shape[1]
    OUT = params["w3"].shape[1]
    OUT_PAD = _round_up(OUT, 8)        # sublane pad only (batch is on lanes)

    # ---- fold eval-mode BatchNorm (which follows ReLU) into the *next* Linear
    scale1 = params["g1"] * jax.lax.rsqrt(params["v1"] + BN_EPS)   # (1, H1)
    shift1 = params["be1"] - params["m1"] * scale1
    scale2 = params["g2"] * jax.lax.rsqrt(params["v2"] + BN_EPS)   # (1, H2)
    shift2 = params["be2"] - params["m2"] * scale2
    w2f = params["w2"] * scale1.T                     # (H1, H2)
    b2f = params["b2"] + shift1 @ params["w2"]        # (1, H2)
    w3f = params["w3"] * scale2.T                     # (H2, OUT)
    b3f = params["b3"] + shift2 @ params["w3"]        # (1, OUT)

    # ---- transpose weights for the batch-on-lanes layout, split W1, pack slab
    blocks = [
        ("wg", params["wg"].T),                                        # (D, D)
        ("w1g", params["w1"][:D, :].T),                                # (H1, D)
        ("w1d", params["w1"][D:, :].T),                                # (H1, D)
        ("w2", w2f.T),                                                 # (H2, H1)
        ("w3", jnp.pad(w3f.T, ((0, OUT_PAD - OUT), (0, 0)))),          # (OUT_PAD, H2)
        ("bg", params["bg"].reshape(D, 1)),
        ("b1", params["b1"].reshape(H1, 1)),
        ("b2", b2f.reshape(H2, 1)),
        ("b3", jnp.pad(b3f.reshape(OUT, 1), ((0, OUT_PAD - OUT), (0, 0)))),
    ]
    slab, offs = _build_param_slab(blocks)

    # ---- batch tiling: batch lives on the 128-lane axis ---------------------
    n_cores = _num_tensorcores_per_chip()
    block_b = min(_round_up(B, 128), _round_up(max_block_b, 128))
    if n_cores >= 2:
        # keep >= n_cores parallel grid steps so both v7x TensorCores get work
        while block_b > 128 and _round_up(B, block_b) // block_b < n_cores:
            block_b = _round_up(block_b // 2, 128)
    B_pad = _round_up(B, block_b)
    grid = B_pad // block_b

    # x streamed in f32 (tiny here; avoids bf16 rounding amplified by 1/tau),
    # laid out (S, D, B): lane-dense vregs, long contiguous HBM rows.
    x_t = jnp.transpose(x.astype(jnp.float32), (1, 2, 0))              # (S, D, B)
    if B_pad != B:
        x_t = jnp.pad(x_t, ((0, 0), (0, 0), (0, B_pad - B)))

    kernel = functools.partial(
        _net_kernel, seq_len=S, d=D, h1=H1, h2=H2, out_pad=OUT_PAD,
        offs=offs, tau=TAU)

    out_t = pl.pallas_call(
        kernel,
        out_shape=jax.ShapeDtypeStruct((OUT_PAD, B_pad), jnp.float32),
        grid_spec=pltpu.PrefetchScalarGridSpec(
            num_scalar_prefetch=0,
            grid=(grid,),
            in_specs=[
                pl.BlockSpec((S, D, block_b), lambda i: (0, 0, i)),
                pl.BlockSpec(slab.shape, lambda i: (0, 0)),
            ],
            out_specs=pl.BlockSpec((OUT_PAD, block_b), lambda i: (0, i)),
        ),
        compiler_params=pltpu.CompilerParams(
            dimension_semantics=("parallel",)),
    )(x_t, slab)

    return out_t[:OUT, :B].T                                            # (B, OUT)


# ----------------------------------------------------------------------------
# Pure-JAX reference (unfused BN, exact module op order) for correctness.
# ----------------------------------------------------------------------------
def reference(x, params):
    x = x.astype(jnp.float32)
    xmax = jnp.max(x, axis=1)
    xmin = jnp.min(x, axis=1)
    soft_max = xmax + TAU * jnp.log(
        jnp.sum(jnp.exp((x - xmax[:, None, :]) / TAU), axis=1))
    soft_min = xmin - TAU * jnp.log(
        jnp.sum(jnp.exp(-(x - xmin[:, None, :]) / TAU), axis=1))
    diff = soft_max - soft_min
    gate = jax.nn.sigmoid(diff @ params["wg"] + params["bg"])
    gated = gate * soft_max + (1.0 - gate) * soft_min
    feat = jnp.concatenate([gated, diff], axis=-1)

    h = jnp.maximum(feat @ params["w1"] + params["b1"], 0.0)               # ReLU
    h = (h - params["m1"]) * jax.lax.rsqrt(params["v1"] + BN_EPS) * params["g1"] \
        + params["be1"]                                                    # BN1
    h = jnp.maximum(h @ params["w2"] + params["b2"], 0.0)
    h = (h - params["m2"]) * jax.lax.rsqrt(params["v2"] + BN_EPS) * params["g2"] \
        + params["be2"]                                                    # BN2
    return h @ params["w3"] + params["b3"]


# ----------------------------------------------------------------------------
# Deterministic parameter init (PyTorch-style uniform for Linear layers,
# non-trivial BatchNorm running stats so the fold path is exercised).
# ----------------------------------------------------------------------------
def init_params(key, input_dim, hidden_dims, output_dim):
    def linear(key, fan_in, fan_out):
        kw, kb = jax.random.split(key)
        bound = 1.0 / jnp.sqrt(fan_in)
        w = jax.random.uniform(kw, (fan_in, fan_out), jnp.float32, -bound, bound)
        b = jax.random.uniform(kb, (1, fan_out), jnp.float32, -bound, bound)
        return w, b

    def bn(key, n):  # gamma, beta, running_mean, running_var
        kg, kb, km, kv = jax.random.split(key, 4)
        gamma = jax.random.uniform(kg, (1, n), jnp.float32, 0.5, 1.5)
        beta = 0.1 * jax.random.normal(kb, (1, n), jnp.float32)
        mean = 0.1 * jax.random.normal(km, (1, n), jnp.float32)
        var = jax.random.uniform(kv, (1, n), jnp.float32, 0.5, 1.5)
        return gamma, beta, mean, var

    k_gate, k1, k2, k3, kbn1, kbn2 = jax.random.split(key, 6)
    h1, h2 = hidden_dims
    wg, bg = linear(k_gate, input_dim, input_dim)
    w1, b1 = linear(k1, 2 * input_dim, h1)
    w2, b2 = linear(k2, h1, h2)
    w3, b3 = linear(k3, h2, output_dim)
    g1, be1, m1, v1 = bn(kbn1, h1)
    g2, be2, m2, v2 = bn(kbn2, h2)
    return dict(wg=wg, bg=bg,
                w1=w1, b1=b1, g1=g1, be1=be1, m1=m1, v1=v1,
                w2=w2, b2=b2, g2=g2, be2=be2, m2=m2, v2=v2,
                w3=w3, b3=b3)


if __name__ == "__main__":
    B, S, D = 256, 8, 16             # batch, set size, input_dim
    HIDDEN = [32, 16]
    OUT = 4

    key = jax.random.PRNGKey(0)
    k_x, k_p = jax.random.split(key)
    x = jax.random.normal(k_x, (B, S, D), jnp.float32)
    params = init_params(k_p, D, HIDDEN, OUT)

    out = jax.block_until_ready(gated_tropical_difference_net(x, params))
    ref = reference(x, params)

    assert out.shape == (B, OUT)
    # Tolerance covers MXU default-precision f32 matmuls (bf16 passes) plus
    # the host-side BatchNorm folding reassociation; all other math is f32.
    assert jnp.allclose(out, ref, atol=1e-2, rtol=1e-2), "mismatch vs reference"
    print("KERNEL_OK")
</pallas_src>

<mosaic_0001>
module attributes {stable_mosaic.version = 11 : i64} {
  func.func @_net_kernel(%arg0: i32, %arg1: memref<8x16x256xf32, #tpu.memory_space<vmem>>, %arg2: memref<176x128xf32, #tpu.memory_space<vmem>>, %arg3: memref<8x256xf32, #tpu.memory_space<vmem>>) attributes {dimension_semantics = [#tpu.dimension_semantics<parallel>], iteration_bounds = array<i64: 1>, scalar_prefetch = 0 : i64, scratch_operands = 0 : i64, tpu.core_type = #tpu.core_type<tc>, window_params = [{transform_indices = @transform_0, window_bounds = array<i64: 8, 16, 256>}, {pipeline_mode = #tpu.pipeline_mode<synchronous>, transform_indices = @transform_1, window_bounds = array<i64: 176, 128>}, {transform_indices = @transform_2, window_bounds = array<i64: 8, 256>}]} {
    %c0 = arith.constant 0 : index
    %c0_0 = arith.constant 0 : index
    %c0_1 = arith.constant 0 : index
    %0 = vector.load %arg1[%c0, %c0_0, %c0_1] : memref<8x16x256xf32, #tpu.memory_space<vmem>>, vector<1x16x256xf32>
    %1 = vector.shape_cast %0 : vector<1x16x256xf32> to vector<16x256xf32>
    %c1 = arith.constant 1 : index
    %c0_2 = arith.constant 0 : index
    %c0_3 = arith.constant 0 : index
    %2 = vector.load %arg1[%c1, %c0_2, %c0_3] : memref<8x16x256xf32, #tpu.memory_space<vmem>>, vector<1x16x256xf32>
    %3 = vector.shape_cast %2 : vector<1x16x256xf32> to vector<16x256xf32>
    %4 = arith.maximumf %1, %3 : vector<16x256xf32>
    %5 = arith.minimumf %1, %3 : vector<16x256xf32>
    %c2 = arith.constant 2 : index
    %c0_4 = arith.constant 0 : index
    %c0_5 = arith.constant 0 : index
    %6 = vector.load %arg1[%c2, %c0_4, %c0_5] : memref<8x16x256xf32, #tpu.memory_space<vmem>>, vector<1x16x256xf32>
    %7 = vector.shape_cast %6 : vector<1x16x256xf32> to vector<16x256xf32>
    %8 = arith.maximumf %4, %7 : vector<16x256xf32>
    %9 = arith.minimumf %5, %7 : vector<16x256xf32>
    %c3 = arith.constant 3 : index
    %c0_6 = arith.constant 0 : index
    %c0_7 = arith.constant 0 : index
    %10 = vector.load %arg1[%c3, %c0_6, %c0_7] : memref<8x16x256xf32, #tpu.memory_space<vmem>>, vector<1x16x256xf32>
    %11 = vector.shape_cast %10 : vector<1x16x256xf32> to vector<16x256xf32>
    %12 = arith.maximumf %8, %11 : vector<16x256xf32>
    %13 = arith.minimumf %9, %11 : vector<16x256xf32>
    %c4 = arith.constant 4 : index
    %c0_8 = arith.constant 0 : index
    %c0_9 = arith.constant 0 : index
    %14 = vector.load %arg1[%c4, %c0_8, %c0_9] : memref<8x16x256xf32, #tpu.memory_space<vmem>>, vector<1x16x256xf32>
    %15 = vector.shape_cast %14 : vector<1x16x256xf32> to vector<16x256xf32>
    %16 = arith.maximumf %12, %15 : vector<16x256xf32>
    %17 = arith.minimumf %13, %15 : vector<16x256xf32>
    %c5 = arith.constant 5 : index
    %c0_10 = arith.constant 0 : index
    %c0_11 = arith.constant 0 : index
    %18 = vector.load %arg1[%c5, %c0_10, %c0_11] : memref<8x16x256xf32, #tpu.memory_space<vmem>>, vector<1x16x256xf32>
    %19 = vector.shape_cast %18 : vector<1x16x256xf32> to vector<16x256xf32>
    %20 = arith.maximumf %16, %19 : vector<16x256xf32>
    %21 = arith.minimumf %17, %19 : vector<16x256xf32>
    %c6 = arith.constant 6 : index
    %c0_12 = arith.constant 0 : index
    %c0_13 = arith.constant 0 : index
    %22 = vector.load %arg1[%c6, %c0_12, %c0_13] : memref<8x16x256xf32, #tpu.memory_space<vmem>>, vector<1x16x256xf32>
    %23 = vector.shape_cast %22 : vector<1x16x256xf32> to vector<16x256xf32>
    %24 = arith.maximumf %20, %23 : vector<16x256xf32>
    %25 = arith.minimumf %21, %23 : vector<16x256xf32>
    %c7 = arith.constant 7 : index
    %c0_14 = arith.constant 0 : index
    %c0_15 = arith.constant 0 : index
    %26 = vector.load %arg1[%c7, %c0_14, %c0_15] : memref<8x16x256xf32, #tpu.memory_space<vmem>>, vector<1x16x256xf32>
    %27 = vector.shape_cast %26 : vector<1x16x256xf32> to vector<16x256xf32>
    %28 = arith.maximumf %24, %27 : vector<16x256xf32>
    %29 = arith.minimumf %25, %27 : vector<16x256xf32>
    %cst = arith.constant 0.000000e+00 : f32
    %30 = vector.broadcast %cst : f32 to vector<16x256xf32>
    %cst_16 = arith.constant 0.000000e+00 : f32
    %31 = vector.broadcast %cst_16 : f32 to vector<16x256xf32>
    %c0_17 = arith.constant 0 : index
    %c0_18 = arith.constant 0 : index
    %c0_19 = arith.constant 0 : index
    %32 = vector.load %arg1[%c0_17, %c0_18, %c0_19] : memref<8x16x256xf32, #tpu.memory_space<vmem>>, vector<1x16x256xf32>
    %33 = vector.shape_cast %32 : vector<1x16x256xf32> to vector<16x256xf32>
    %34 = arith.subf %33, %28 : vector<16x256xf32>
    %cst_20 = arith.constant 5.000000e+00 : f32
    %35 = vector.broadcast %cst_20 : f32 to vector<16x256xf32>
    %36 = arith.mulf %34, %35 : vector<16x256xf32>
    %37 = math.exp %36 : vector<16x256xf32>
    %38 = arith.addf %30, %37 : vector<16x256xf32>
    %39 = arith.subf %29, %33 : vector<16x256xf32>
    %cst_21 = arith.constant 5.000000e+00 : f32
    %40 = vector.broadcast %cst_21 : f32 to vector<16x256xf32>
    %41 = arith.mulf %39, %40 : vector<16x256xf32>
    %42 = math.exp %41 : vector<16x256xf32>
    %43 = arith.addf %31, %42 : vector<16x256xf32>
    %c1_22 = arith.constant 1 : index
    %c0_23 = arith.constant 0 : index
    %c0_24 = arith.constant 0 : index
    %44 = vector.load %arg1[%c1_22, %c0_23, %c0_24] : memref<8x16x256xf32, #tpu.memory_space<vmem>>, vector<1x16x256xf32>
    %45 = vector.shape_cast %44 : vector<1x16x256xf32> to vector<16x256xf32>
    %46 = arith.subf %45, %28 : vector<16x256xf32>
    %cst_25 = arith.constant 5.000000e+00 : f32
    %47 = vector.broadcast %cst_25 : f32 to vector<16x256xf32>
    %48 = arith.mulf %46, %47 : vector<16x256xf32>
    %49 = math.exp %48 : vector<16x256xf32>
    %50 = arith.addf %38, %49 : vector<16x256xf32>
    %51 = arith.subf %29, %45 : vector<16x256xf32>
    %cst_26 = arith.constant 5.000000e+00 : f32
    %52 = vector.broadcast %cst_26 : f32 to vector<16x256xf32>
    %53 = arith.mulf %51, %52 : vector<16x256xf32>
    %54 = math.exp %53 : vector<16x256xf32>
    %55 = arith.addf %43, %54 : vector<16x256xf32>
    %c2_27 = arith.constant 2 : index
    %c0_28 = arith.constant 0 : index
    %c0_29 = arith.constant 0 : index
    %56 = vector.load %arg1[%c2_27, %c0_28, %c0_29] : memref<8x16x256xf32, #tpu.memory_space<vmem>>, vector<1x16x256xf32>
    %57 = vector.shape_cast %56 : vector<1x16x256xf32> to vector<16x256xf32>
    %58 = arith.subf %57, %28 : vector<16x256xf32>
    %cst_30 = arith.constant 5.000000e+00 : f32
    %59 = vector.broadcast %cst_30 : f32 to vector<16x256xf32>
    %60 = arith.mulf %58, %59 : vector<16x256xf32>
    %61 = math.exp %60 : vector<16x256xf32>
    %62 = arith.addf %50, %61 : vector<16x256xf32>
    %63 = arith.subf %29, %57 : vector<16x256xf32>
    %cst_31 = arith.constant 5.000000e+00 : f32
    %64 = vector.broadcast %cst_31 : f32 to vector<16x256xf32>
    %65 = arith.mulf %63, %64 : vector<16x256xf32>
    %66 = math.exp %65 : vector<16x256xf32>
    %67 = arith.addf %55, %66 : vector<16x256xf32>
    %c3_32 = arith.constant 3 : index
    %c0_33 = arith.constant 0 : index
    %c0_34 = arith.constant 0 : index
    %68 = vector.load %arg1[%c3_32, %c0_33, %c0_34] : memref<8x16x256xf32, #tpu.memory_space<vmem>>, vector<1x16x256xf32>
    %69 = vector.shape_cast %68 : vector<1x16x256xf32> to vector<16x256xf32>
    %70 = arith.subf %69, %28 : vector<16x256xf32>
    %cst_35 = arith.constant 5.000000e+00 : f32
    %71 = vector.broadcast %cst_35 : f32 to vector<16x256xf32>
    %72 = arith.mulf %70, %71 : vector<16x256xf32>
    %73 = math.exp %72 : vector<16x256xf32>
    %74 = arith.addf %62, %73 : vector<16x256xf32>
    %75 = arith.subf %29, %69 : vector<16x256xf32>
    %cst_36 = arith.constant 5.000000e+00 : f32
    %76 = vector.broadcast %cst_36 : f32 to vector<16x256xf32>
    %77 = arith.mulf %75, %76 : vector<16x256xf32>
    %78 = math.exp %77 : vector<16x256xf32>
    %79 = arith.addf %67, %78 : vector<16x256xf32>
    %c4_37 = arith.constant 4 : index
    %c0_38 = arith.constant 0 : index
    %c0_39 = arith.constant 0 : index
    %80 = vector.load %arg1[%c4_37, %c0_38, %c0_39] : memref<8x16x256xf32, #tpu.memory_space<vmem>>, vector<1x16x256xf32>
    %81 = vector.shape_cast %80 : vector<1x16x256xf32> to vector<16x256xf32>
    %82 = arith.subf %81, %28 : vector<16x256xf32>
    %cst_40 = arith.constant 5.000000e+00 : f32
    %83 = vector.broadcast %cst_40 : f32 to vector<16x256xf32>
    %84 = arith.mulf %82, %83 : vector<16x256xf32>
    %85 = math.exp %84 : vector<16x256xf32>
    %86 = arith.addf %74, %85 : vector<16x256xf32>
    %87 = arith.subf %29, %81 : vector<16x256xf32>
    %cst_41 = arith.constant 5.000000e+00 : f32
    %88 = vector.broadcast %cst_41 : f32 to vector<16x256xf32>
    %89 = arith.mulf %87, %88 : vector<16x256xf32>
    %90 = math.exp %89 : vector<16x256xf32>
    %91 = arith.addf %79, %90 : vector<16x256xf32>
    %c5_42 = arith.constant 5 : index
    %c0_43 = arith.constant 0 : index
    %c0_44 = arith.constant 0 : index
    %92 = vector.load %arg1[%c5_42, %c0_43, %c0_44] : memref<8x16x256xf32, #tpu.memory_space<vmem>>, vector<1x16x256xf32>
    %93 = vector.shape_cast %92 : vector<1x16x256xf32> to vector<16x256xf32>
    %94 = arith.subf %93, %28 : vector<16x256xf32>
    %cst_45 = arith.constant 5.000000e+00 : f32
    %95 = vector.broadcast %cst_45 : f32 to vector<16x256xf32>
    %96 = arith.mulf %94, %95 : vector<16x256xf32>
    %97 = math.exp %96 : vector<16x256xf32>
    %98 = arith.addf %86, %97 : vector<16x256xf32>
    %99 = arith.subf %29, %93 : vector<16x256xf32>
    %cst_46 = arith.constant 5.000000e+00 : f32
    %100 = vector.broadcast %cst_46 : f32 to vector<16x256xf32>
    %101 = arith.mulf %99, %100 : vector<16x256xf32>
    %102 = math.exp %101 : vector<16x256xf32>
    %103 = arith.addf %91, %102 : vector<16x256xf32>
    %c6_47 = arith.constant 6 : index
    %c0_48 = arith.constant 0 : index
    %c0_49 = arith.constant 0 : index
    %104 = vector.load %arg1[%c6_47, %c0_48, %c0_49] : memref<8x16x256xf32, #tpu.memory_space<vmem>>, vector<1x16x256xf32>
    %105 = vector.shape_cast %104 : vector<1x16x256xf32> to vector<16x256xf32>
    %106 = arith.subf %105, %28 : vector<16x256xf32>
    %cst_50 = arith.constant 5.000000e+00 : f32
    %107 = vector.broadcast %cst_50 : f32 to vector<16x256xf32>
    %108 = arith.mulf %106, %107 : vector<16x256xf32>
    %109 = math.exp %108 : vector<16x256xf32>
    %110 = arith.addf %98, %109 : vector<16x256xf32>
    %111 = arith.subf %29, %105 : vector<16x256xf32>
    %cst_51 = arith.constant 5.000000e+00 : f32
    %112 = vector.broadcast %cst_51 : f32 to vector<16x256xf32>
    %113 = arith.mulf %111, %112 : vector<16x256xf32>
    %114 = math.exp %113 : vector<16x256xf32>
    %115 = arith.addf %103, %114 : vector<16x256xf32>
    %c7_52 = arith.constant 7 : index
    %c0_53 = arith.constant 0 : index
    %c0_54 = arith.constant 0 : index
    %116 = vector.load %arg1[%c7_52, %c0_53, %c0_54] : memref<8x16x256xf32, #tpu.memory_space<vmem>>, vector<1x16x256xf32>
    %117 = vector.shape_cast %116 : vector<1x16x256xf32> to vector<16x256xf32>
    %118 = arith.subf %117, %28 : vector<16x256xf32>
    %cst_55 = arith.constant 5.000000e+00 : f32
    %119 = vector.broadcast %cst_55 : f32 to vector<16x256xf32>
    %120 = arith.mulf %118, %119 : vector<16x256xf32>
    %121 = math.exp %120 : vector<16x256xf32>
    %122 = arith.addf %110, %121 : vector<16x256xf32>
    %123 = arith.subf %29, %117 : vector<16x256xf32>
    %cst_56 = arith.constant 5.000000e+00 : f32
    %124 = vector.broadcast %cst_56 : f32 to vector<16x256xf32>
    %125 = arith.mulf %123, %124 : vector<16x256xf32>
    %126 = math.exp %125 : vector<16x256xf32>
    %127 = arith.addf %115, %126 : vector<16x256xf32>
    %128 = math.log %122 : vector<16x256xf32>
    %cst_57 = arith.constant 2.000000e-01 : f32
    %129 = vector.broadcast %cst_57 : f32 to vector<16x256xf32>
    %130 = arith.mulf %129, %128 : vector<16x256xf32>
    %131 = arith.addf %28, %130 : vector<16x256xf32>
    %132 = math.log %127 : vector<16x256xf32>
    %cst_58 = arith.constant 2.000000e-01 : f32
    %133 = vector.broadcast %cst_58 : f32 to vector<16x256xf32>
    %134 = arith.mulf %133, %132 : vector<16x256xf32>
    %135 = arith.subf %29, %134 : vector<16x256xf32>
    %136 = arith.subf %131, %135 : vector<16x256xf32>
    %c0_59 = arith.constant 0 : index
    %c0_60 = arith.constant 0 : index
    %137 = vector.load %arg2[%c0_59, %c0_60] : memref<176x128xf32, #tpu.memory_space<vmem>>, vector<16x16xf32>
    %c104 = arith.constant 104 : index
    %c0_61 = arith.constant 0 : index
    %138 = vector.load %arg2[%c104, %c0_61] : memref<176x128xf32, #tpu.memory_space<vmem>>, vector<16x1xf32>
    %cst_62 = arith.constant dense<0.000000e+00> : vector<16x256xf32>
    %139 = tpu.matmul %137, %136, %cst_62 {dimension_numbers = #tpu.dot_dimension_numbers<[1], [0], [0], [1], [0, 0, 1, 1], [], []>} : vector<16x16xf32>, vector<16x256xf32>, vector<16x256xf32> -> vector<16x256xf32>
    %140 = vector.broadcast %138 : vector<16x1xf32> to vector<16x256xf32>
    %141 = arith.addf %139, %140 : vector<16x256xf32>
    %142 = arith.negf %141 : vector<16x256xf32>
    %143 = math.exp %142 : vector<16x256xf32>
    %cst_63 = arith.constant 1.000000e+00 : f32
    %144 = vector.broadcast %cst_63 : f32 to vector<16x256xf32>
    %145 = arith.addf %144, %143 : vector<16x256xf32>
    %146 = arith.divf %144, %145 : vector<16x256xf32>
    %147 = arith.mulf %146, %131 : vector<16x256xf32>
    %cst_64 = arith.constant 1.000000e+00 : f32
    %148 = vector.broadcast %cst_64 : f32 to vector<16x256xf32>
    %149 = arith.subf %148, %146 : vector<16x256xf32>
    %150 = arith.mulf %149, %135 : vector<16x256xf32>
    %151 = arith.addf %147, %150 : vector<16x256xf32>
    %c16 = arith.constant 16 : index
    %c0_65 = arith.constant 0 : index
    %152 = vector.load %arg2[%c16, %c0_65] : memref<176x128xf32, #tpu.memory_space<vmem>>, vector<32x16xf32>
    %c48 = arith.constant 48 : index
    %c0_66 = arith.constant 0 : index
    %153 = vector.load %arg2[%c48, %c0_66] : memref<176x128xf32, #tpu.memory_space<vmem>>, vector<32x16xf32>
    %c120 = arith.constant 120 : index
    %c0_67 = arith.constant 0 : index
    %154 = vector.load %arg2[%c120, %c0_67] : memref<176x128xf32, #tpu.memory_space<vmem>>, vector<32x1xf32>
    %cst_68 = arith.constant dense<0.000000e+00> : vector<32x256xf32>
    %155 = tpu.matmul %152, %151, %cst_68 {dimension_numbers = #tpu.dot_dimension_numbers<[1], [0], [0], [1], [0, 0, 1, 1], [], []>} : vector<32x16xf32>, vector<16x256xf32>, vector<32x256xf32> -> vector<32x256xf32>
    %cst_69 = arith.constant dense<0.000000e+00> : vector<32x256xf32>
    %156 = tpu.matmul %153, %136, %cst_69 {dimension_numbers = #tpu.dot_dimension_numbers<[1], [0], [0], [1], [0, 0, 1, 1], [], []>} : vector<32x16xf32>, vector<16x256xf32>, vector<32x256xf32> -> vector<32x256xf32>
    %157 = arith.addf %155, %156 : vector<32x256xf32>
    %158 = vector.broadcast %154 : vector<32x1xf32> to vector<32x256xf32>
    %159 = arith.addf %157, %158 : vector<32x256xf32>
    %cst_70 = arith.constant 0.000000e+00 : f32
    %160 = vector.broadcast %cst_70 : f32 to vector<32x256xf32>
    %161 = arith.maximumf %159, %160 : vector<32x256xf32>
    %c80 = arith.constant 80 : index
    %c0_71 = arith.constant 0 : index
    %162 = vector.load %arg2[%c80, %c0_71] : memref<176x128xf32, #tpu.memory_space<vmem>>, vector<16x32xf32>
    %c152 = arith.constant 152 : index
    %c0_72 = arith.constant 0 : index
    %163 = vector.load %arg2[%c152, %c0_72] : memref<176x128xf32, #tpu.memory_space<vmem>>, vector<16x1xf32>
    %cst_73 = arith.constant dense<0.000000e+00> : vector<16x256xf32>
    %164 = tpu.matmul %162, %161, %cst_73 {dimension_numbers = #tpu.dot_dimension_numbers<[1], [0], [0], [1], [0, 0, 1, 1], [], []>} : vector<16x32xf32>, vector<32x256xf32>, vector<16x256xf32> -> vector<16x256xf32>
    %165 = vector.broadcast %163 : vector<16x1xf32> to vector<16x256xf32>
    %166 = arith.addf %164, %165 : vector<16x256xf32>
    %cst_74 = arith.constant 0.000000e+00 : f32
    %167 = vector.broadcast %cst_74 : f32 to vector<16x256xf32>
    %168 = arith.maximumf %166, %167 : vector<16x256xf32>
    %c96 = arith.constant 96 : index
    %c0_75 = arith.constant 0 : index
    %169 = vector.load %arg2[%c96, %c0_75] : memref<176x128xf32, #tpu.memory_space<vmem>>, vector<8x16xf32>
    %c168 = arith.constant 168 : index
    %c0_76 = arith.constant 0 : index
    %170 = vector.load %arg2[%c168, %c0_76] : memref<176x128xf32, #tpu.memory_space<vmem>>, vector<8x1xf32>
    %cst_77 = arith.constant dense<0.000000e+00> : vector<8x256xf32>
    %171 = tpu.matmul %169, %168, %cst_77 {dimension_numbers = #tpu.dot_dimension_numbers<[1], [0], [0], [1], [0, 0, 1, 1], [], []>} : vector<8x16xf32>, vector<16x256xf32>, vector<8x256xf32> -> vector<8x256xf32>
    %172 = vector.broadcast %170 : vector<8x1xf32> to vector<8x256xf32>
    %173 = arith.addf %171, %172 : vector<8x256xf32>
    %c0_78 = arith.constant 0 : index
    %c0_79 = arith.constant 0 : index
    %174 = vector.load %arg3[%c0_78, %c0_79] : memref<8x256xf32, #tpu.memory_space<vmem>>, vector<8x256xf32>
    tpu.vector_store %arg3[%c0_78, %c0_79], %173 {strides = array<i32>} : memref<8x256xf32, #tpu.memory_space<vmem>>, vector<8x256xf32>,
    return
  }
  func.func @transform_0(%arg0: i32) -> (i32, i32, i32) {
    %c0_i32 = arith.constant 0 : i32
    %c0_i32_0 = arith.constant 0 : i32
    %c0_i32_1 = arith.constant 0 : i32
    return %c0_i32, %c0_i32_0, %arg0 : i32, i32, i32
  }
  func.func @transform_1(%arg0: i32) -> (i32, i32) {
    %c0_i32 = arith.constant 0 : i32
    %c0_i32_0 = arith.constant 0 : i32
    %c0_i32_1 = arith.constant 0 : i32
    return %c0_i32, %c0_i32_0 : i32, i32
  }
  func.func @transform_2(%arg0: i32) -> (i32, i32) {
    %c0_i32 = arith.constant 0 : i32
    %c0_i32_0 = arith.constant 0 : i32
    return %c0_i32, %arg0 : i32, i32
  }
}

</mosaic_0001>

<llo_original>
// kernel: tpu_custom_call.1
$region0: #{tpu_custom_call.1}
  #allocation0 [shape = 'u32[]', space=smem, size = 0x4, offset = 0x4, fixed_abs, tag = 'smem constant byte address 0x4 - core index']
  #allocation1 [shape = 'u32[144,128]{1,0:T(1,128)}', space=vmem, size = 0x12000, scoped, tag = 'internal scratch']
  %s0 = inlined_call_operand.hbm [shape: f32[8,16,256], index: 0, kind: input, shape index: {}]
  %s1 = inlined_call_operand.hbm [shape: f32[176,128], index: 1, kind: input, shape index: {}]
  %s2 = inlined_call_operand.hbm [shape: f32[8,256], index: 2, kind: output, shape index: {}]
  %s3 = sld [smem:[#allocation0]]
  $region26: #{tpu_custom_call.1} parent=0
    _
  %s5 = ssub.s32 1, %s3
  %s6 = scalar_select 0, %s5, %s3
  $region1: #{tpu_custom_call.1} parent=0
    #allocation2 [shape = 'u8[131072]{0}', space=vmem, size = 0x20000, scoped, tag = 'input window, operand 0, single buffered']
    #allocation3 [shape = 's32[1]{0}', space=sflag, size = 0x4, scoped, tag = 'scoped memory for tpu_custom_call.1']
    #allocation4 [shape = 's32[1]{0}', space=sflag, size = 0x4, scoped, tag = 'scoped memory for tpu_custom_call.1']
    #allocation5 [shape = 'u8[90112]{0}', space=vmem, size = 0x16000, scoped, tag = 'input window, operand 1, single buffered']
    #allocation6 [shape = 's32[1]{0}', space=sflag, size = 0x4, scoped, tag = 'scoped memory for tpu_custom_call.1']
    #allocation7 [shape = 'u8[8192]{0}', space=vmem, size = 0x2000, scoped, tag = 'output window, operand 0, single buffered']
    %7 = vsyncpa [#allocation3], 0
    %8 = vsyncpa [#allocation6], 0
    %9 = vsyncpa [#allocation4], 0
    // Predicated region
    $region2: #{tpu_custom_call.1} parent=1 // pred_check
      _
    $region3: #{tpu_custom_call.1} parent=1 // pred_check_branch
      %11 = sbr.rel (0) target = $region5
    $region4: #{tpu_custom_call.1} parent=1 // pred_region
      %s13 = ssub.s32 4096, 4096
      %14 = vsyncadd [#allocation3], %s13
      %s15 = sshll.u32 [#allocation2], 4
      %s16 = int_to_ptr.vmem [resolvable:$true] %s15
      %21 = dma.hbm_to_vmem [thread:$0]  %s0, 4096, %s16, [#allocation3], 256, 256, 16
    $region5: #{tpu_custom_call.1} parent=1 // pred_fallthru
      _
    // Predicated region
    $region6: #{tpu_custom_call.1} parent=1 // pred_check
      _
    $region7: #{tpu_custom_call.1} parent=1 // pred_check_branch
      %23 = sbr.rel (0) target = $region9
    $region8: #{tpu_custom_call.1} parent=1 // pred_region
      %s25 = ssub.s32 2816, 2816
      %26 = vsyncadd [#allocation6], %s25
      %s27 = sshll.u32 [#allocation5], 4
      %s28 = int_to_ptr.vmem [resolvable:$true] %s27
      %33 = dma.hbm_to_vmem [thread:$0]  %s1, 2816, %s28, [#allocation6], 128, 128, 8
    $region9: #{tpu_custom_call.1} parent=1 // pred_fallthru
      _
    // Predicated region
    $region10: #{tpu_custom_call.1} parent=1 // pred_check
      _
    $region11: #{tpu_custom_call.1} parent=1 // pred_check_branch
      %35 = sbr.rel (0) target = $region13
    $region12: #{tpu_custom_call.1} parent=1 // pred_region
      %36 = dma.done [#allocation3], 4096
    $region13: #{tpu_custom_call.1} parent=1 // pred_fallthru
      _
    // Predicated region
    $region14: #{tpu_custom_call.1} parent=1 // pred_check
      _
    $region15: #{tpu_custom_call.1} parent=1 // pred_check_branch
      %38 = sbr.rel (0) target = $region17
    $region16: #{tpu_custom_call.1} parent=1 // pred_region
      %39 = dma.done [#allocation6], 2816
    $region17: #{tpu_custom_call.1} parent=1 // pred_fallthru
      _
    %v40 = vld [vmem:[#allocation2] sm:$0xff]
    %v41 = vld [vmem:[#allocation2 + $0x8] sm:$0xff]
    %v42 = vld [vmem:[#allocation2 + $0x10] sm:$0xff]
    %v43 = vld [vmem:[#allocation2 + $0x18] sm:$0xff]
    %s44 = scalar_lea.vmem [#allocation2], 32
    %v45 = vld [vmem:[%s44] sm:$0xff]
    %v46 = vld [vmem:[%s44 + $0x8] sm:$0xff]
    %v47 = vld [vmem:[%s44 + $0x10] sm:$0xff]
    %v48 = vld [vmem:[%s44 + $0x18] sm:$0xff]
    %v49 = vmax.f32 %v40, %v45
    %v50 = vmax.f32 %v41, %v46
    %v51 = vmax.f32 %v42, %v47
    %v52 = vmax.f32 %v43, %v48
    %v53 = vmin.f32 %v40, %v45
    %v54 = vmin.f32 %v41, %v46
    %v55 = vmin.f32 %v42, %v47
    %v56 = vmin.f32 %v43, %v48
    %s57 = scalar_lea.vmem [#allocation2], 64
    %v58 = vld [vmem:[%s57] sm:$0xff]
    %v59 = vld [vmem:[%s57 + $0x8] sm:$0xff]
    %v60 = vld [vmem:[%s57 + $0x10] sm:$0xff]
    %v61 = vld [vmem:[%s57 + $0x18] sm:$0xff]
    %v62 = vmax.f32 %v49, %v58
    %v63 = vmax.f32 %v50, %v59
    %v64 = vmax.f32 %v51, %v60
    %v65 = vmax.f32 %v52, %v61
    %v66 = vmin.f32 %v53, %v58
    %v67 = vmin.f32 %v54, %v59
    %v68 = vmin.f32 %v55, %v60
    %v69 = vmin.f32 %v56, %v61
    %s70 = scalar_lea.vmem [#allocation2], 96
    %v71 = vld [vmem:[%s70] sm:$0xff]
    %v72 = vld [vmem:[%s70 + $0x8] sm:$0xff]
    %v73 = vld [vmem:[%s70 + $0x10] sm:$0xff]
    %v74 = vld [vmem:[%s70 + $0x18] sm:$0xff]
    %v75 = vmax.f32 %v62, %v71
    %v76 = vmax.f32 %v63, %v72
    %v77 = vmax.f32 %v64, %v73
    %v78 = vmax.f32 %v65, %v74
    %v79 = vmin.f32 %v66, %v71
    %v80 = vmin.f32 %v67, %v72
    %v81 = vmin.f32 %v68, %v73
    %v82 = vmin.f32 %v69, %v74
    %s83 = scalar_lea.vmem [#allocation2], 128
    %v84 = vld [vmem:[%s83] sm:$0xff]
    %v85 = vld [vmem:[%s83 + $0x8] sm:$0xff]
    %v86 = vld [vmem:[%s83 + $0x10] sm:$0xff]
    %v87 = vld [vmem:[%s83 + $0x18] sm:$0xff]
    %v88 = vmax.f32 %v75, %v84
    %v89 = vmax.f32 %v76, %v85
    %v90 = vmax.f32 %v77, %v86
    %v91 = vmax.f32 %v78, %v87
    %v92 = vmin.f32 %v79, %v84
    %v93 = vmin.f32 %v80, %v85
    %v94 = vmin.f32 %v81, %v86
    %v95 = vmin.f32 %v82, %v87
    %s96 = scalar_lea.vmem [#allocation2], 160
    %v97 = vld [vmem:[%s96] sm:$0xff]
    %v98 = vld [vmem:[%s96 + $0x8] sm:$0xff]
    %v99 = vld [vmem:[%s96 + $0x10] sm:$0xff]
    %v100 = vld [vmem:[%s96 + $0x18] sm:$0xff]
    %v101 = vmax.f32 %v88, %v97
    %v102 = vmax.f32 %v89, %v98
    %v103 = vmax.f32 %v90, %v99
    %v104 = vmax.f32 %v91, %v100
    %v105 = vmin.f32 %v92, %v97
    %v106 = vmin.f32 %v93, %v98
    %v107 = vmin.f32 %v94, %v99
    %v108 = vmin.f32 %v95, %v100
    %s109 = scalar_lea.vmem [#allocation2], 192
    %v110 = vld [vmem:[%s109] sm:$0xff]
    %v111 = vld [vmem:[%s109 + $0x8] sm:$0xff]
    %v112 = vld [vmem:[%s109 + $0x10] sm:$0xff]
    %v113 = vld [vmem:[%s109 + $0x18] sm:$0xff]
    %v114 = vmax.f32 %v101, %v110
    %v115 = vmax.f32 %v102, %v111
    %v116 = vmax.f32 %v103, %v112
    %v117 = vmax.f32 %v104, %v113
    %v118 = vmin.f32 %v105, %v110
    %v119 = vmin.f32 %v106, %v111
    %v120 = vmin.f32 %v107, %v112
    %v121 = vmin.f32 %v108, %v113
    %s122 = scalar_lea.vmem [#allocation2], 224
    %v123 = vld [vmem:[%s122] sm:$0xff]
    %v124 = vld [vmem:[%s122 + $0x8] sm:$0xff]
    %v125 = vld [vmem:[%s122 + $0x10] sm:$0xff]
    %v126 = vld [vmem:[%s122 + $0x18] sm:$0xff]
    %v127 = vmax.f32 %v114, %v123
    %v128 = vmax.f32 %v115, %v124
    %v129 = vmax.f32 %v116, %v125
    %v130 = vmax.f32 %v117, %v126
    %v131 = vmin.f32 %v118, %v123
    %v132 = vmin.f32 %v119, %v124
    %v133 = vmin.f32 %v120, %v125
    %v134 = vmin.f32 %v121, %v126
    %v135 = vsub.f32 %v40, %v127
    %v136 = vsub.f32 %v41, %v128
    %v137 = vsub.f32 %v42, %v129
    %v138 = vsub.f32 %v43, %v130
    %v139 = vmul.f32 %v135, 5.0
    %v140 = vmul.f32 %v136, 5.0
    %v141 = vmul.f32 %v137, 5.0
    %v142 = vmul.f32 %v138, 5.0
    %v143 = vmul.f32 %v139, 1.442695
    %v144 = vpow.pop %v143
    %v145 = vmul.f32 %v140, 1.442695
    %v146 = vpow.pop %v145
    %v147 = vmul.f32 %v141, 1.442695
    %v148 = vpow.pop %v147
    %v149 = vmul.f32 %v142, 1.442695
    %v150 = vpow.pop %v149
    %v151 = vadd.f32 %v144, 0.0
    %v152 = vadd.f32 %v146, 0.0
    %v153 = vadd.f32 %v148, 0.0
    %v154 = vadd.f32 %v150, 0.0
    %v155 = vsub.f32 %v131, %v40
    %v156 = vsub.f32 %v132, %v41
    %v157 = vsub.f32 %v133, %v42
    %v158 = vsub.f32 %v134, %v43
    %v159 = vmul.f32 %v155, 5.0
    %v160 = vmul.f32 %v156, 5.0
    %v161 = vmul.f32 %v157, 5.0
    %v162 = vmul.f32 %v158, 5.0
    %v163 = vmul.f32 %v159, 1.442695
    %v164 = vpow.pop %v163
    %v165 = vmul.f32 %v160, 1.442695
    %v166 = vpow.pop %v165
    %v167 = vmul.f32 %v161, 1.442695
    %v168 = vpow.pop %v167
    %v169 = vmul.f32 %v162, 1.442695
    %v170 = vpow.pop %v169
    %v171 = vadd.f32 %v164, 0.0
    %v172 = vadd.f32 %v166, 0.0
    %v173 = vadd.f32 %v168, 0.0
    %v174 = vadd.f32 %v170, 0.0
    %v175 = vsub.f32 %v45, %v127
    %v176 = vsub.f32 %v46, %v128
    %v177 = vsub.f32 %v47, %v129
    %v178 = vsub.f32 %v48, %v130
    %v179 = vmul.f32 %v175, 5.0
    %v180 = vmul.f32 %v176, 5.0
    %v181 = vmul.f32 %v177, 5.0
    %v182 = vmul.f32 %v178, 5.0
    %v183 = vmul.f32 %v179, 1.442695
    %v184 = vpow.pop %v183
    %v185 = vmul.f32 %v180, 1.442695
    %v186 = vpow.pop %v185
    %v187 = vmul.f32 %v181, 1.442695
    %v188 = vpow.pop %v187
    %v189 = vmul.f32 %v182, 1.442695
    %v190 = vpow.pop %v189
    %v191 = vadd.f32 %v151, %v184
    %v192 = vadd.f32 %v152, %v186
    %v193 = vadd.f32 %v153, %v188
    %v194 = vadd.f32 %v154, %v190
    %v195 = vsub.f32 %v131, %v45
    %v196 = vsub.f32 %v132, %v46
    %v197 = vsub.f32 %v133, %v47
    %v198 = vsub.f32 %v134, %v48
    %v199 = vmul.f32 %v195, 5.0
    %v200 = vmul.f32 %v196, 5.0
    %v201 = vmul.f32 %v197, 5.0
    %v202 = vmul.f32 %v198, 5.0
    %v203 = vmul.f32 %v199, 1.442695
    %v204 = vpow.pop %v203
    %v205 = vmul.f32 %v200, 1.442695
    %v206 = vpow.pop %v205
    %v207 = vmul.f32 %v201, 1.442695
    %v208 = vpow.pop %v207
    %v209 = vmul.f32 %v202, 1.442695
    %v210 = vpow.pop %v209
    %v211 = vadd.f32 %v171, %v204
    %v212 = vadd.f32 %v172, %v206
    %v213 = vadd.f32 %v173, %v208
    %v214 = vadd.f32 %v174, %v210
    %v215 = vsub.f32 %v58, %v127
    %v216 = vsub.f32 %v59, %v128
    %v217 = vsub.f32 %v60, %v129
    %v218 = vsub.f32 %v61, %v130
    %v219 = vmul.f32 %v215, 5.0
    %v220 = vmul.f32 %v216, 5.0
    %v221 = vmul.f32 %v217, 5.0
    %v222 = vmul.f32 %v218, 5.0
    %v223 = vmul.f32 %v219, 1.442695
    %v224 = vpow.pop %v223
    %v225 = vmul.f32 %v220, 1.442695
    %v226 = vpow.pop %v225
    %v227 = vmul.f32 %v221, 1.442695
    %v228 = vpow.pop %v227
    %v229 = vmul.f32 %v222, 1.442695
    %v230 = vpow.pop %v229
    %v231 = vadd.f32 %v191, %v224
    %v232 = vadd.f32 %v192, %v226
    %v233 = vadd.f32 %v193, %v228
    %v234 = vadd.f32 %v194, %v230
    %v235 = vsub.f32 %v131, %v58
    %v236 = vsub.f32 %v132, %v59
    %v237 = vsub.f32 %v133, %v60
    %v238 = vsub.f32 %v134, %v61
    %v239 = vmul.f32 %v235, 5.0
    %v240 = vmul.f32 %v236, 5.0
    %v241 = vmul.f32 %v237, 5.0
    %v242 = vmul.f32 %v238, 5.0
    %v243 = vmul.f32 %v239, 1.442695
    %v244 = vpow.pop %v243
    %v245 = vmul.f32 %v240, 1.442695
    %v246 = vpow.pop %v245
    %v247 = vmul.f32 %v241, 1.442695
    %v248 = vpow.pop %v247
    %v249 = vmul.f32 %v242, 1.442695
    %v250 = vpow.pop %v249
    %v251 = vadd.f32 %v211, %v244
    %v252 = vadd.f32 %v212, %v246
    %v253 = vadd.f32 %v213, %v248
    %v254 = vadd.f32 %v214, %v250
    %v255 = vsub.f32 %v71, %v127
    %v256 = vsub.f32 %v72, %v128
    %v257 = vsub.f32 %v73, %v129
    %v258 = vsub.f32 %v74, %v130
    %v259 = vmul.f32 %v255, 5.0
    %v260 = vmul.f32 %v256, 5.0
    %v261 = vmul.f32 %v257, 5.0
    %v262 = vmul.f32 %v258, 5.0
    %v263 = vmul.f32 %v259, 1.442695
    %v264 = vpow.pop %v263
    %v265 = vmul.f32 %v260, 1.442695
    %v266 = vpow.pop %v265
    %v267 = vmul.f32 %v261, 1.442695
    %v268 = vpow.pop %v267
    %v269 = vmul.f32 %v262, 1.442695
    %v270 = vpow.pop %v269
    %v271 = vadd.f32 %v231, %v264
    %v272 = vadd.f32 %v232, %v266
    %v273 = vadd.f32 %v233, %v268
    %v274 = vadd.f32 %v234, %v270
    %v275 = vsub.f32 %v131, %v71
    %v276 = vsub.f32 %v132, %v72
    %v277 = vsub.f32 %v133, %v73
    %v278 = vsub.f32 %v134, %v74
    %v279 = vmul.f32 %v275, 5.0
    %v280 = vmul.f32 %v276, 5.0
    %v281 = vmul.f32 %v277, 5.0
    %v282 = vmul.f32 %v278, 5.0
    %v283 = vmul.f32 %v279, 1.442695
    %v284 = vpow.pop %v283
    %v285 = vmul.f32 %v280, 1.442695
    %v286 = vpow.pop %v285
    %v287 = vmul.f32 %v281, 1.442695
    %v288 = vpow.pop %v287
    %v289 = vmul.f32 %v282, 1.442695
    %v290 = vpow.pop %v289
    %v291 = vadd.f32 %v251, %v284
    %v292 = vadd.f32 %v252, %v286
    %v293 = vadd.f32 %v253, %v288
    %v294 = vadd.f32 %v254, %v290
    %v295 = vsub.f32 %v84, %v127
    %v296 = vsub.f32 %v85, %v128
    %v297 = vsub.f32 %v86, %v129
    %v298 = vsub.f32 %v87, %v130
    %v299 = vmul.f32 %v295, 5.0
    %v300 = vmul.f32 %v296, 5.0
    %v301 = vmul.f32 %v297, 5.0
    %v302 = vmul.f32 %v298, 5.0
    %v303 = vmul.f32 %v299, 1.442695
    %v304 = vpow.pop %v303
    %v305 = vmul.f32 %v300, 1.442695
    %v306 = vpow.pop %v305
    %v307 = vmul.f32 %v301, 1.442695
    %v308 = vpow.pop %v307
    %v309 = vmul.f32 %v302, 1.442695
    %v310 = vpow.pop %v309
    %v311 = vadd.f32 %v271, %v304
    %v312 = vadd.f32 %v272, %v306
    %v313 = vadd.f32 %v273, %v308
    %v314 = vadd.f32 %v274, %v310
    %v315 = vsub.f32 %v131, %v84
    %v316 = vsub.f32 %v132, %v85
    %v317 = vsub.f32 %v133, %v86
    %v318 = vsub.f32 %v134, %v87
    %v319 = vmul.f32 %v315, 5.0
    %v320 = vmul.f32 %v316, 5.0
    %v321 = vmul.f32 %v317, 5.0
    %v322 = vmul.f32 %v318, 5.0
    %v323 = vmul.f32 %v319, 1.442695
    %v324 = vpow.pop %v323
    %v325 = vmul.f32 %v320, 1.442695
    %v326 = vpow.pop %v325
    %v327 = vmul.f32 %v321, 1.442695
    %v328 = vpow.pop %v327
    %v329 = vmul.f32 %v322, 1.442695
    %v330 = vpow.pop %v329
    %v331 = vadd.f32 %v291, %v324
    %v332 = vadd.f32 %v292, %v326
    %v333 = vadd.f32 %v293, %v328
    %v334 = vadd.f32 %v294, %v330
    %v335 = vsub.f32 %v97, %v127
    %v336 = vsub.f32 %v98, %v128
    %v337 = vsub.f32 %v99, %v129
    %v338 = vsub.f32 %v100, %v130
    %v339 = vmul.f32 %v335, 5.0
    %v340 = vmul.f32 %v336, 5.0
    %v341 = vmul.f32 %v337, 5.0
    %v342 = vmul.f32 %v338, 5.0
    %v343 = vmul.f32 %v339, 1.442695
    %v344 = vpow.pop %v343
    %v345 = vmul.f32 %v340, 1.442695
    %v346 = vpow.pop %v345
    %v347 = vmul.f32 %v341, 1.442695
    %v348 = vpow.pop %v347
    %v349 = vmul.f32 %v342, 1.442695
    %v350 = vpow.pop %v349
    %v351 = vadd.f32 %v311, %v344
    %v352 = vadd.f32 %v312, %v346
    %v353 = vadd.f32 %v313, %v348
    %v354 = vadd.f32 %v314, %v350
    %v355 = vsub.f32 %v131, %v97
    %v356 = vsub.f32 %v132, %v98
    %v357 = vsub.f32 %v133, %v99
    %v358 = vsub.f32 %v134, %v100
    %v359 = vmul.f32 %v355, 5.0
    %v360 = vmul.f32 %v356, 5.0
    %v361 = vmul.f32 %v357, 5.0
    %v362 = vmul.f32 %v358, 5.0
    %v363 = vmul.f32 %v359, 1.442695
    %v364 = vpow.pop %v363
    %v365 = vmul.f32 %v360, 1.442695
    %v366 = vpow.pop %v365
    %v367 = vmul.f32 %v361, 1.442695
    %v368 = vpow.pop %v367
    %v369 = vmul.f32 %v362, 1.442695
    %v370 = vpow.pop %v369
    %v371 = vadd.f32 %v331, %v364
    %v372 = vadd.f32 %v332, %v366
    %v373 = vadd.f32 %v333, %v368
    %v374 = vadd.f32 %v334, %v370
    %v375 = vsub.f32 %v110, %v127
    %v376 = vsub.f32 %v111, %v128
    %v377 = vsub.f32 %v112, %v129
    %v378 = vsub.f32 %v113, %v130
    %v379 = vmul.f32 %v375, 5.0
    %v380 = vmul.f32 %v376, 5.0
    %v381 = vmul.f32 %v377, 5.0
    %v382 = vmul.f32 %v378, 5.0
    %v383 = vmul.f32 %v379, 1.442695
    %v384 = vpow.pop %v383
    %v385 = vmul.f32 %v380, 1.442695
    %v386 = vpow.pop %v385
    %v387 = vmul.f32 %v381, 1.442695
    %v388 = vpow.pop %v387
    %v389 = vmul.f32 %v382, 1.442695
    %v390 = vpow.pop %v389
    %v391 = vadd.f32 %v351, %v384
    %v392 = vadd.f32 %v352, %v386
    %v393 = vadd.f32 %v353, %v388
    %v394 = vadd.f32 %v354, %v390
    %v395 = vsub.f32 %v131, %v110
    %v396 = vsub.f32 %v132, %v111
    %v397 = vsub.f32 %v133, %v112
    %v398 = vsub.f32 %v134, %v113
    %v399 = vmul.f32 %v395, 5.0
    %v400 = vmul.f32 %v396, 5.0
    %v401 = vmul.f32 %v397, 5.0
    %v402 = vmul.f32 %v398, 5.0
    %v403 = vmul.f32 %v399, 1.442695
    %v404 = vpow.pop %v403
    %v405 = vmul.f32 %v400, 1.442695
    %v406 = vpow.pop %v405
    %v407 = vmul.f32 %v401, 1.442695
    %v408 = vpow.pop %v407
    %v409 = vmul.f32 %v402, 1.442695
    %v410 = vpow.pop %v409
    %v411 = vadd.f32 %v371, %v404
    %v412 = vadd.f32 %v372, %v406
    %v413 = vadd.f32 %v373, %v408
    %v414 = vadd.f32 %v374, %v410
    %v415 = vsub.f32 %v123, %v127
    %v416 = vsub.f32 %v124, %v128
    %v417 = vsub.f32 %v125, %v129
    %v418 = vsub.f32 %v126, %v130
    %v419 = vmul.f32 %v415, 5.0
    %v420 = vmul.f32 %v416, 5.0
    %v421 = vmul.f32 %v417, 5.0
    %v422 = vmul.f32 %v418, 5.0
    %v423 = vmul.f32 %v419, 1.442695
    %v424 = vpow.pop %v423
    %v425 = vmul.f32 %v420, 1.442695
    %v426 = vpow.pop %v425
    %v427 = vmul.f32 %v421, 1.442695
    %v428 = vpow.pop %v427
    %v429 = vmul.f32 %v422, 1.442695
    %v430 = vpow.pop %v429
    %v431 = vadd.f32 %v391, %v424
    %v432 = vadd.f32 %v392, %v426
    %v433 = vadd.f32 %v393, %v428
    %v434 = vadd.f32 %v394, %v430
    %v435 = vsub.f32 %v131, %v123
    %v436 = vsub.f32 %v132, %v124
    %v437 = vsub.f32 %v133, %v125
    %v438 = vsub.f32 %v134, %v126
    %v439 = vmul.f32 %v435, 5.0
    %v440 = vmul.f32 %v436, 5.0
    %v441 = vmul.f32 %v437, 5.0
    %v442 = vmul.f32 %v438, 5.0
    %v443 = vmul.f32 %v439, 1.442695
    %v444 = vpow.pop %v443
    %v445 = vmul.f32 %v440, 1.442695
    %v446 = vpow.pop %v445
    %v447 = vmul.f32 %v441, 1.442695
    %v448 = vpow.pop %v447
    %v449 = vmul.f32 %v442, 1.442695
    %v450 = vpow.pop %v449
    %v451 = vadd.f32 %v411, %v444
    %v452 = vadd.f32 %v412, %v446
    %v453 = vadd.f32 %v413, %v448
    %v454 = vadd.f32 %v414, %v450
    %v455 = vlog2.pop %v431
    %v456 = vmul.f32 %v455, 0.6931472
    %v457 = vlog2.pop %v432
    %v458 = vmul.f32 %v457, 0.6931472
    %v459 = vlog2.pop %v433
    %v460 = vmul.f32 %v459, 0.6931472
    %v461 = vlog2.pop %v434
    %v462 = vmul.f32 %v461, 0.6931472
    %v463 = vmul.f32 %v456, 0.2
    %v464 = vmul.f32 %v458, 0.2
    %v465 = vmul.f32 %v460, 0.2
    %v466 = vmul.f32 %v462, 0.2
    %v467 = vadd.f32 %v127, %v463
    %v468 = vadd.f32 %v128, %v464
    %v469 = vadd.f32 %v129, %v465
    %v470 = vadd.f32 %v130, %v466
    %v471 = vlog2.pop %v451
    %v472 = vmul.f32 %v471, 0.6931472
    %v473 = vlog2.pop %v452
    %v474 = vmul.f32 %v473, 0.6931472
    %v475 = vlog2.pop %v453
    %v476 = vmul.f32 %v475, 0.6931472
    %v477 = vlog2.pop %v454
    %v478 = vmul.f32 %v477, 0.6931472
    %v479 = vmul.f32 %v472, 0.2
    %v480 = vmul.f32 %v474, 0.2
    %v481 = vmul.f32 %v476, 0.2
    %v482 = vmul.f32 %v478, 0.2
    %v483 = vsub.f32 %v131, %v479
    %v484 = vsub.f32 %v132, %v480
    %v485 = vsub.f32 %v133, %v481
    %v486 = vsub.f32 %v134, %v482
    %v487 = vsub.f32 %v467, %v483
    %v488 = vsub.f32 %v468, %v484
    %v489 = vsub.f32 %v469, %v485
    %v490 = vsub.f32 %v470, %v486
    %v491 = vld [vmem:[#allocation5] sm:$0xff]
    %v492 = vld [vmem:[#allocation5 + $0x8] sm:$0xff]
    %v493 = vld [vmem:[#allocation5 + $0x68] sm:$0xff]
    %v494 = vld [vmem:[#allocation5 + $0x70] sm:$0xff]
    %496 = vset.pattern.permute.xlu0 0
    %497 = vperm.xlu0 %496, %v493
    %v498 = vpop.permute.xlu0 %497
    %501 = vset.pattern.permute.xlu0 0
    %502 = vperm.xlu0 %501, %v494
    %v503 = vpop.permute.xlu0 %502
    %vm505 = vcmask 130048
    %v507 = vsel %vm505, %v491, 0
    %v510 = vsel %vm505, %v492, 0
    %512 = vmatprep.subr.mxu0 %v488
    %513 = vmatpush1.msra.mxu0 %v487
    %514 = vmatprep.subr.mxu0 %v490
    %515 = vmatpush1.msra.mxu0 %v489
    %516 = vmatprep.subr.mxu0 0.0
    %517 = vmatpush1.msra.mxu0 0.0
    %518 = vmatprep.subr.mxu0 0.0
    %519 = vmatpush1.msra.mxu0 0.0
    %520 = vmatprep.subr.mxu0 0.0
    %521 = vmatpush1.msra.mxu0 0.0
    %522 = vmatprep.subr.mxu0 0.0
    %523 = vmatpush1.msra.mxu0 0.0
    %524 = vmatprep.subr.mxu0 0.0
    %525 = vmatpush1.msra.mxu0 0.0
    %526 = vmatprep.subr.mxu0 0.0
    %527 = vmatpush1.msra.mxu0 0.0
    %528 = vmatprep.subr.mxu0 0.0
    %529 = vmatpush1.msra.mxu0 0.0
    %530 = vmatprep.subr.mxu0 0.0
    %531 = vmatpush1.msra.mxu0 0.0
    %532 = vmatprep.subr.mxu0 0.0
    %533 = vmatpush1.msra.mxu0 0.0
    %534 = vmatprep.subr.mxu0 0.0
    %535 = vmatpush1.msra.mxu0 0.0
    %536 = vmatprep.subr.mxu0 0.0
    %537 = vmatpush1.msra.mxu0 0.0
    %538 = vmatprep.subr.mxu0 0.0
    %539 = vmatpush1.msra.mxu0 0.0
    %540 = vmatprep.subr.mxu0 0.0
    %541 = vmatpush1.msra.mxu0 0.0
    %542 = vmatprep.subr.mxu0 0.0
    %543 = vmatpush1.msra.mxu0 0.0
    %544 = vmatprep.subr.mxu0 0.0
    %545 = vmatpush1.msra.mxu0 0.0
    %546 = vmatprep.subr.mxu0 0.0
    %547 = vmatpush1.msra.mxu0 0.0
    %548 = vmatprep.subr.mxu0 0.0
    %549 = vmatpush1.msra.mxu0 0.0
    %550 = vmatprep.subr.mxu0 0.0
    %551 = vmatpush1.msra.mxu0 0.0
    %552 = vmatprep.subr.mxu0 0.0
    %553 = vmatpush1.msra.mxu0 0.0
    %554 = vmatprep.subr.mxu0 0.0
    %555 = vmatpush1.msra.mxu0 0.0
    %556 = vmatprep.subr.mxu0 0.0
    %557 = vmatpush1.msra.mxu0 0.0
    %558 = vmatprep.subr.mxu0 0.0
    %559 = vmatpush1.msra.mxu0 0.0
    %560 = vmatprep.subr.mxu0 0.0
    %561 = vmatpush1.msra.mxu0 0.0
    %562 = vmatprep.subr.mxu0 0.0
    %563 = vmatpush1.msra.mxu0 0.0
    %564 = vmatprep.subr.mxu0 0.0
    %565 = vmatpush1.msra.mxu0 0.0
    %566 = vmatprep.subr.mxu0 0.0
    %567 = vmatpush1.msra.mxu0 0.0
    %568 = vmatprep.subr.mxu0 0.0
    %569 = vmatpush1.msra.mxu0 0.0
    %570 = vmatprep.subr.mxu0 0.0
    %571 = vmatpush1.msra.mxu0 0.0
    %572 = vmatprep.subr.mxu0 0.0
    %573 = vmatpush1.msra.mxu0 0.0
    %574 = vmatprep.subr.mxu0 0.0
    %575 = vmatpush1.msra.mxu0 0.0
    %576 = vmatprep.mubr.f32.mxu0 0.0
    %577 = vmatmul.mubr.f32.gmra.mrb[0].mxu0 %v507
    %v578 = vpop.f32.mrb[0].mxu0
    %v579 = vadd.f32 %v498, %v578
    %v580 = vpop.f32.mrb[0].mxu0
    %v581 = vadd.f32 %v498, %v580
    %582 = vmatprep.mubr.f32.mxu0 0.0
    %583 = vmatmul.mubr.f32.gmra.mrb[0].mxu0 %v510
    %v584 = vpop.f32.mrb[0].mxu0
    %v585 = vadd.f32 %v503, %v584
    %v586 = vpop.f32.mrb[0].mxu0
    %v587 = vadd.f32 %v503, %v586
    %588 = vdwg.mxu0
    %v589 = vxor.u32 %v579, 2147483648
    %v590 = vxor.u32 %v581, 2147483648
    %v591 = vxor.u32 %v585, 2147483648
    %v592 = vxor.u32 %v587, 2147483648
    %v593 = vmul.f32 %v589, 1.442695
    %v594 = vpow.pop %v593
    %v595 = vmul.f32 %v590, 1.442695
    %v596 = vpow.pop %v595
    %v597 = vmul.f32 %v591, 1.442695
    %v598 = vpow.pop %v597
    %v599 = vmul.f32 %v592, 1.442695
    %v600 = vpow.pop %v599
    %v601 = vadd.f32 %v594, 1.0
    %v602 = vadd.f32 %v596, 1.0
    %v603 = vadd.f32 %v598, 1.0
    %v604 = vadd.f32 %v600, 1.0
    %v605 = vrcp.pop %v601
    %v606 = vmul.f32 1.0, %v605
    %v607 = vrcp.pop %v602
    %v608 = vmul.f32 1.0, %v607
    %v609 = vrcp.pop %v603
    %v610 = vmul.f32 1.0, %v609
    %v611 = vrcp.pop %v604
    %v612 = vmul.f32 1.0, %v611
    %v613 = vmul.f32 %v606, %v467
    %v614 = vmul.f32 %v608, %v468
    %v615 = vmul.f32 %v610, %v469
    %v616 = vmul.f32 %v612, %v470
    %v617 = vsub.f32 1.0, %v606
    %v618 = vsub.f32 1.0, %v608
    %v619 = vsub.f32 1.0, %v610
    %v620 = vsub.f32 1.0, %v612
    %v621 = vmul.f32 %v617, %v483
    %v622 = vmul.f32 %v618, %v484
    %v623 = vmul.f32 %v619, %v485
    %v624 = vmul.f32 %v620, %v486
    %v625 = vadd.f32 %v613, %v621
    %v626 = vadd.f32 %v614, %v622
    %v627 = vadd.f32 %v615, %v623
    %v628 = vadd.f32 %v616, %v624
    %v629 = vld [vmem:[#allocation5 + $0x10] sm:$0xff]
    %v630 = vld [vmem:[#allocation5 + $0x18] sm:$0xff]
    %v631 = vld [vmem:[#allocation5 + $0x20] sm:$0xff]
    %v632 = vld [vmem:[#allocation5 + $0x28] sm:$0xff]
    %v633 = vld [vmem:[#allocation5 + $0x30] sm:$0xff]
    %v634 = vld [vmem:[#allocation5 + $0x38] sm:$0xff]
    %v635 = vld [vmem:[#allocation5 + $0x40] sm:$0xff]
    %v636 = vld [vmem:[#allocation5 + $0x48] sm:$0xff]
    %v637 = vld [vmem:[#allocation5 + $0x78] sm:$0xff]
    %v638 = vld [vmem:[#allocation5 + $0x80] sm:$0xff]
    %v639 = vld [vmem:[#allocation5 + $0x88] sm:$0xff]
    %v640 = vld [vmem:[#allocation5 + $0x90] sm:$0xff]
    %v642 = vsel %vm505, %v633, 0
    %v645 = vsel %vm505, %v634, 0
    %v648 = vsel %vm505, %v635, 0
    %v651 = vsel %vm505, %v636, 0
    %653 = vmatprep.subr.mxu0 %v488
    %654 = vmatpush1.msra.mxu0 %v487
    %655 = vmatprep.subr.mxu0 %v490
    %656 = vmatpush1.msra.mxu0 %v489
    %657 = vmatprep.subr.mxu0 0.0
    %658 = vmatpush1.msra.mxu0 0.0
    %659 = vmatprep.subr.mxu0 0.0
    %660 = vmatpush1.msra.mxu0 0.0
    %661 = vmatprep.subr.mxu0 0.0
    %662 = vmatpush1.msra.mxu0 0.0
    %663 = vmatprep.subr.mxu0 0.0
    %664 = vmatpush1.msra.mxu0 0.0
    %665 = vmatprep.subr.mxu0 0.0
    %666 = vmatpush1.msra.mxu0 0.0
    %667 = vmatprep.subr.mxu0 0.0
    %668 = vmatpush1.msra.mxu0 0.0
    %669 = vmatprep.subr.mxu0 0.0
    %670 = vmatpush1.msra.mxu0 0.0
    %671 = vmatprep.subr.mxu0 0.0
    %672 = vmatpush1.msra.mxu0 0.0
    %673 = vmatprep.subr.mxu0 0.0
    %674 = vmatpush1.msra.mxu0 0.0
    %675 = vmatprep.subr.mxu0 0.0
    %676 = vmatpush1.msra.mxu0 0.0
    %677 = vmatprep.subr.mxu0 0.0
    %678 = vmatpush1.msra.mxu0 0.0
    %679 = vmatprep.subr.mxu0 0.0
    %680 = vmatpush1.msra.mxu0 0.0
    %681 = vmatprep.subr.mxu0 0.0
    %682 = vmatpush1.msra.mxu0 0.0
    %683 = vmatprep.subr.mxu0 0.0
    %684 = vmatpush1.msra.mxu0 0.0
    %685 = vmatprep.subr.mxu0 0.0
    %686 = vmatpush1.msra.mxu0 0.0
    %687 = vmatprep.subr.mxu0 0.0
    %688 = vmatpush1.msra.mxu0 0.0
    %689 = vmatprep.subr.mxu0 0.0
    %690 = vmatpush1.msra.mxu0 0.0
    %691 = vmatprep.subr.mxu0 0.0
    %692 = vmatpush1.msra.mxu0 0.0
    %693 = vmatprep.subr.mxu0 0.0
    %694 = vmatpush1.msra.mxu0 0.0
    %695 = vmatprep.subr.mxu0 0.0
    %696 = vmatpush1.msra.mxu0 0.0
    %697 = vmatprep.subr.mxu0 0.0
    %698 = vmatpush1.msra.mxu0 0.0
    %699 = vmatprep.subr.mxu0 0.0
    %700 = vmatpush1.msra.mxu0 0.0
    %701 = vmatprep.subr.mxu0 0.0
    %702 = vmatpush1.msra.mxu0 0.0
    %703 = vmatprep.subr.mxu0 0.0
    %704 = vmatpush1.msra.mxu0 0.0
    %705 = vmatprep.subr.mxu0 0.0
    %706 = vmatpush1.msra.mxu0 0.0
    %707 = vmatprep.subr.mxu0 0.0
    %708 = vmatpush1.msra.mxu0 0.0
    %709 = vmatprep.subr.mxu0 0.0
    %710 = vmatpush1.msra.mxu0 0.0
    %711 = vmatprep.subr.mxu0 0.0
    %712 = vmatpush1.msra.mxu0 0.0
    %713 = vmatprep.subr.mxu0 0.0
    %714 = vmatpush1.msra.mxu0 0.0
    %715 = vmatprep.subr.mxu0 0.0
    %716 = vmatpush1.msra.mxu0 0.0
    %717 = vmatprep.mubr.f32.mxu0 0.0
    %718 = vmatmul.mubr.f32.gmra.mrb[0].mxu0 %v642
    %v719 = vpop.f32.mrb[0].mxu0
    %v720 = vadd.f32 0.0, %v719
    %v721 = vpop.f32.mrb[0].mxu0
    %v722 = vadd.f32 0.0, %v721
    %723 = vmatprep.mubr.f32.mxu0 0.0
    %724 = vmatmul.mubr.f32.gmra.mrb[0].mxu0 %v645
    %v725 = vpop.f32.mrb[0].mxu0
    %v726 = vadd.f32 0.0, %v725
    %v727 = vpop.f32.mrb[0].mxu0
    %v728 = vadd.f32 0.0, %v727
    %729 = vmatprep.mubr.f32.mxu0 0.0
    %730 = vmatmul.mubr.f32.gmra.mrb[0].mxu0 %v648
    %v731 = vpop.f32.mrb[0].mxu0
    %v732 = vadd.f32 0.0, %v731
    %v733 = vpop.f32.mrb[0].mxu0
    %v734 = vadd.f32 0.0, %v733
    %735 = vmatprep.mubr.f32.mxu0 0.0
    %736 = vmatmul.mubr.f32.gmra.mrb[0].mxu0 %v651
    %v737 = vpop.f32.mrb[0].mxu0
    %v738 = vadd.f32 0.0, %v737
    %v739 = vpop.f32.mrb[0].mxu0
    %v740 = vadd.f32 0.0, %v739
    %741 = vdwg.mxu0
    %v743 = vsel %vm505, %v629, 0
    %v746 = vsel %vm505, %v630, 0
    %v749 = vsel %vm505, %v631, 0
    %v752 = vsel %vm505, %v632, 0
    %754 = vmatprep.subr.mxu0 %v626
    %755 = vmatpush1.msra.mxu0 %v625
    %756 = vmatprep.subr.mxu0 %v628
    %757 = vmatpush1.msra.mxu0 %v627
    %758 = vmatprep.subr.mxu0 0.0
    %759 = vmatpush1.msra.mxu0 0.0
    %760 = vmatprep.subr.mxu0 0.0
    %761 = vmatpush1.msra.mxu0 0.0
    %762 = vmatprep.subr.mxu0 0.0
    %763 = vmatpush1.msra.mxu0 0.0
    %764 = vmatprep.subr.mxu0 0.0
    %765 = vmatpush1.msra.mxu0 0.0
    %766 = vmatprep.subr.mxu0 0.0
    %767 = vmatpush1.msra.mxu0 0.0
    %768 = vmatprep.subr.mxu0 0.0
    %769 = vmatpush1.msra.mxu0 0.0
    %770 = vmatprep.subr.mxu0 0.0
    %771 = vmatpush1.msra.mxu0 0.0
    %772 = vmatprep.subr.mxu0 0.0
    %773 = vmatpush1.msra.mxu0 0.0
    %774 = vmatprep.subr.mxu0 0.0
    %775 = vmatpush1.msra.mxu0 0.0
    %776 = vmatprep.subr.mxu0 0.0
    %777 = vmatpush1.msra.mxu0 0.0
    %778 = vmatprep.subr.mxu0 0.0
    %779 = vmatpush1.msra.mxu0 0.0
    %780 = vmatprep.subr.mxu0 0.0
    %781 = vmatpush1.msra.mxu0 0.0
    %782 = vmatprep.subr.mxu0 0.0
    %783 = vmatpush1.msra.mxu0 0.0
    %784 = vmatprep.subr.mxu0 0.0
    %785 = vmatpush1.msra.mxu0 0.0
    %786 = vmatprep.subr.mxu0 0.0
    %787 = vmatpush1.msra.mxu0 0.0
    %788 = vmatprep.subr.mxu0 0.0
    %789 = vmatpush1.msra.mxu0 0.0
    %790 = vmatprep.subr.mxu0 0.0
    %791 = vmatpush1.msra.mxu0 0.0
    %792 = vmatprep.subr.mxu0 0.0
    %793 = vmatpush1.msra.mxu0 0.0
    %794 = vmatprep.subr.mxu0 0.0
    %795 = vmatpush1.msra.mxu0 0.0
    %796 = vmatprep.subr.mxu0 0.0
    %797 = vmatpush1.msra.mxu0 0.0
    %798 = vmatprep.subr.mxu0 0.0
    %799 = vmatpush1.msra.mxu0 0.0
    %800 = vmatprep.subr.mxu0 0.0
    %801 = vmatpush1.msra.mxu0 0.0
    %802 = vmatprep.subr.mxu0 0.0
    %803 = vmatpush1.msra.mxu0 0.0
    %804 = vmatprep.subr.mxu0 0.0
    %805 = vmatpush1.msra.mxu0 0.0
    %806 = vmatprep.subr.mxu0 0.0
    %807 = vmatpush1.msra.mxu0 0.0
    %808 = vmatprep.subr.mxu0 0.0
    %809 = vmatpush1.msra.mxu0 0.0
    %810 = vmatprep.subr.mxu0 0.0
    %811 = vmatpush1.msra.mxu0 0.0
    %812 = vmatprep.subr.mxu0 0.0
    %813 = vmatpush1.msra.mxu0 0.0
    %814 = vmatprep.subr.mxu0 0.0
    %815 = vmatpush1.msra.mxu0 0.0
    %816 = vmatprep.subr.mxu0 0.0
    %817 = vmatpush1.msra.mxu0 0.0
    %818 = vmatprep.mubr.f32.mxu0 0.0
    %819 = vmatmul.mubr.f32.gmra.mrb[0].mxu0 %v743
    %v820 = vpop.f32.mrb[0].mxu0
    %v821 = vadd.f32 %v720, %v820
    %v822 = vpop.f32.mrb[0].mxu0
    %v823 = vadd.f32 %v722, %v822
    %824 = vmatprep.mubr.f32.mxu0 0.0
    %825 = vmatmul.mubr.f32.gmra.mrb[0].mxu0 %v746
    %v826 = vpop.f32.mrb[0].mxu0
    %v827 = vadd.f32 %v726, %v826
    %v828 = vpop.f32.mrb[0].mxu0
    %v829 = vadd.f32 %v728, %v828
    %830 = vmatprep.mubr.f32.mxu0 0.0
    %831 = vmatmul.mubr.f32.gmra.mrb[0].mxu0 %v749
    %v832 = vpop.f32.mrb[0].mxu0
    %v833 = vadd.f32 %v732, %v832
    %v834 = vpop.f32.mrb[0].mxu0
    %v835 = vadd.f32 %v734, %v834
    %836 = vmatprep.mubr.f32.mxu0 0.0
    %837 = vmatmul.mubr.f32.gmra.mrb[0].mxu0 %v752
    %v838 = vpop.f32.mrb[0].mxu0
    %v839 = vadd.f32 %v738, %v838
    %v840 = vpop.f32.mrb[0].mxu0
    %v841 = vadd.f32 %v740, %v840
    %842 = vdwg.mxu0
    %844 = vset.pattern.permute.xlu0 0
    %845 = vperm.xlu0 %844, %v637
    %v846 = vpop.permute.xlu0 %845
    %849 = vset.pattern.permute.xlu0 0
    %850 = vperm.xlu0 %849, %v638
    %v851 = vpop.permute.xlu0 %850
    %854 = vset.pattern.permute.xlu0 0
    %855 = vperm.xlu0 %854, %v639
    %v856 = vpop.permute.xlu0 %855
    %859 = vset.pattern.permute.xlu0 0
    %860 = vperm.xlu0 %859, %v640
    %v861 = vpop.permute.xlu0 %860
    %v863 = vadd.f32 %v821, %v846
    %v864 = vadd.f32 %v823, %v846
    %v865 = vadd.f32 %v827, %v851
    %v866 = vadd.f32 %v829, %v851
    %v867 = vadd.f32 %v833, %v856
    %v868 = vadd.f32 %v835, %v856
    %v869 = vadd.f32 %v839, %v861
    %v870 = vadd.f32 %v841, %v861
    %v871 = vmax.f32 %v863, 0.0
    %v872 = vmax.f32 %v864, 0.0
    %v873 = vmax.f32 %v865, 0.0
    %v874 = vmax.f32 %v866, 0.0
    %v875 = vmax.f32 %v867, 0.0
    %v876 = vmax.f32 %v868, 0.0
    %v877 = vmax.f32 %v869, 0.0
    %v878 = vmax.f32 %v870, 0.0
    %v879 = vld [vmem:[#allocation5 + $0x50] sm:$0xff]
    %v880 = vld [vmem:[#allocation5 + $0x58] sm:$0xff]
    %v881 = vld [vmem:[#allocation5 + $0x98] sm:$0xff]
    %v882 = vld [vmem:[#allocation5 + $0xa0] sm:$0xff]
    %884 = vset.pattern.permute.xlu0 0
    %885 = vperm.xlu0 %884, %v881
    %v886 = vpop.permute.xlu0 %885
    %889 = vset.pattern.permute.xlu0 0
    %890 = vperm.xlu0 %889, %v882
    %v891 = vpop.permute.xlu0 %890
    %vm893 = vcmask 261120
    %v895 = vsel %vm893, %v879, 0
    %v898 = vsel %vm893, %v880, 0
    %900 = vmatprep.subr.mxu0 %v872
    %901 = vmatpush1.msra.mxu0 %v871
    %902 = vmatprep.subr.mxu0 %v874
    %903 = vmatpush1.msra.mxu0 %v873
    %904 = vmatprep.subr.mxu0 %v876
    %905 = vmatpush1.msra.mxu0 %v875
    %906 = vmatprep.subr.mxu0 %v878
    %907 = vmatpush1.msra.mxu0 %v877
    %908 = vmatprep.subr.mxu0 0.0
    %909 = vmatpush1.msra.mxu0 0.0
    %910 = vmatprep.subr.mxu0 0.0
    %911 = vmatpush1.msra.mxu0 0.0
    %912 = vmatprep.subr.mxu0 0.0
    %913 = vmatpush1.msra.mxu0 0.0
    %914 = vmatprep.subr.mxu0 0.0
    %915 = vmatpush1.msra.mxu0 0.0
    %916 = vmatprep.subr.mxu0 0.0
    %917 = vmatpush1.msra.mxu0 0.0
    %918 = vmatprep.subr.mxu0 0.0
    %919 = vmatpush1.msra.mxu0 0.0
    %920 = vmatprep.subr.mxu0 0.0
    %921 = vmatpush1.msra.mxu0 0.0
    %922 = vmatprep.subr.mxu0 0.0
    %923 = vmatpush1.msra.mxu0 0.0
    %924 = vmatprep.subr.mxu0 0.0
    %925 = vmatpush1.msra.mxu0 0.0
    %926 = vmatprep.subr.mxu0 0.0
    %927 = vmatpush1.msra.mxu0 0.0
    %928 = vmatprep.subr.mxu0 0.0
    %929 = vmatpush1.msra.mxu0 0.0
    %930 = vmatprep.subr.mxu0 0.0
    %931 = vmatpush1.msra.mxu0 0.0
    %932 = vmatprep.subr.mxu0 0.0
    %933 = vmatpush1.msra.mxu0 0.0
    %934 = vmatprep.subr.mxu0 0.0
    %935 = vmatpush1.msra.mxu0 0.0
    %936 = vmatprep.subr.mxu0 0.0
    %937 = vmatpush1.msra.mxu0 0.0
    %938 = vmatprep.subr.mxu0 0.0
    %939 = vmatpush1.msra.mxu0 0.0
    %940 = vmatprep.subr.mxu0 0.0
    %941 = vmatpush1.msra.mxu0 0.0
    %942 = vmatprep.subr.mxu0 0.0
    %943 = vmatpush1.msra.mxu0 0.0
    %944 = vmatprep.subr.mxu0 0.0
    %945 = vmatpush1.msra.mxu0 0.0
    %946 = vmatprep.subr.mxu0 0.0
    %947 = vmatpush1.msra.mxu0 0.0
    %948 = vmatprep.subr.mxu0 0.0
    %949 = vmatpush1.msra.mxu0 0.0
    %950 = vmatprep.subr.mxu0 0.0
    %951 = vmatpush1.msra.mxu0 0.0
    %952 = vmatprep.subr.mxu0 0.0
    %953 = vmatpush1.msra.mxu0 0.0
    %954 = vmatprep.subr.mxu0 0.0
    %955 = vmatpush1.msra.mxu0 0.0
    %956 = vmatprep.subr.mxu0 0.0
    %957 = vmatpush1.msra.mxu0 0.0
    %958 = vmatprep.subr.mxu0 0.0
    %959 = vmatpush1.msra.mxu0 0.0
    %960 = vmatprep.subr.mxu0 0.0
    %961 = vmatpush1.msra.mxu0 0.0
    %962 = vmatprep.subr.mxu0 0.0
    %963 = vmatpush1.msra.mxu0 0.0
    %964 = vmatprep.mubr.f32.mxu0 0.0
    %965 = vmatmul.mubr.f32.gmra.mrb[0].mxu0 %v895
    %v966 = vpop.f32.mrb[0].mxu0
    %v967 = vadd.f32 %v886, %v966
    %v968 = vpop.f32.mrb[0].mxu0
    %v969 = vadd.f32 %v886, %v968
    %970 = vmatprep.mubr.f32.mxu0 0.0
    %971 = vmatmul.mubr.f32.gmra.mrb[0].mxu0 %v898
    %v972 = vpop.f32.mrb[0].mxu0
    %v973 = vadd.f32 %v891, %v972
    %v974 = vpop.f32.mrb[0].mxu0
    %v975 = vadd.f32 %v891, %v974
    %976 = vdwg.mxu0
    %v977 = vmax.f32 %v967, 0.0
    %v978 = vmax.f32 %v969, 0.0
    %v979 = vmax.f32 %v973, 0.0
    %v980 = vmax.f32 %v975, 0.0
    %v981 = vld [vmem:[#allocation5 + $0x60] sm:$0xff]
    %v982 = vld [vmem:[#allocation5 + $0xa8] sm:$0xff]
    %984 = vset.pattern.permute.xlu0 0
    %985 = vperm.xlu0 %984, %v982
    %v986 = vpop.permute.xlu0 %985
    %v989 = vsel %vm505, %v981, 0
    %991 = vmatprep.subr.mxu0 %v978
    %992 = vmatpush1.msra.mxu0 %v977
    %993 = vmatprep.subr.mxu0 %v980
    %994 = vmatpush1.msra.mxu0 %v979
    %995 = vmatprep.subr.mxu0 0.0
    %996 = vmatpush1.msra.mxu0 0.0
    %997 = vmatprep.subr.mxu0 0.0
    %998 = vmatpush1.msra.mxu0 0.0
    %999 = vmatprep.subr.mxu0 0.0
    %1000 = vmatpush1.msra.mxu0 0.0
    %1001 = vmatprep.subr.mxu0 0.0
    %1002 = vmatpush1.msra.mxu0 0.0
    %1003 = vmatprep.subr.mxu0 0.0
    %1004 = vmatpush1.msra.mxu0 0.0
    %1005 = vmatprep.subr.mxu0 0.0
    %1006 = vmatpush1.msra.mxu0 0.0
    %1007 = vmatprep.subr.mxu0 0.0
    %1008 = vmatpush1.msra.mxu0 0.0
    %1009 = vmatprep.subr.mxu0 0.0
    %1010 = vmatpush1.msra.mxu0 0.0
    %1011 = vmatprep.subr.mxu0 0.0
    %1012 = vmatpush1.msra.mxu0 0.0
    %1013 = vmatprep.subr.mxu0 0.0
    %1014 = vmatpush1.msra.mxu0 0.0
    %1015 = vmatprep.subr.mxu0 0.0
    %1016 = vmatpush1.msra.mxu0 0.0
    %1017 = vmatprep.subr.mxu0 0.0
    %1018 = vmatpush1.msra.mxu0 0.0
    %1019 = vmatprep.subr.mxu0 0.0
    %1020 = vmatpush1.msra.mxu0 0.0
    %1021 = vmatprep.subr.mxu0 0.0
    %1022 = vmatpush1.msra.mxu0 0.0
    %1023 = vmatprep.subr.mxu0 0.0
    %1024 = vmatpush1.msra.mxu0 0.0
    %1025 = vmatprep.subr.mxu0 0.0
    %1026 = vmatpush1.msra.mxu0 0.0
    %1027 = vmatprep.subr.mxu0 0.0
    %1028 = vmatpush1.msra.mxu0 0.0
    %1029 = vmatprep.subr.mxu0 0.0
    %1030 = vmatpush1.msra.mxu0 0.0
    %1031 = vmatprep.subr.mxu0 0.0
    %1032 = vmatpush1.msra.mxu0 0.0
    %1033 = vmatprep.subr.mxu0 0.0
    %1034 = vmatpush1.msra.mxu0 0.0
    %1035 = vmatprep.subr.mxu0 0.0
    %1036 = vmatpush1.msra.mxu0 0.0
    %1037 = vmatprep.subr.mxu0 0.0
    %1038 = vmatpush1.msra.mxu0 0.0
    %1039 = vmatprep.subr.mxu0 0.0
    %1040 = vmatpush1.msra.mxu0 0.0
    %1041 = vmatprep.subr.mxu0 0.0
    %1042 = vmatpush1.msra.mxu0 0.0
    %1043 = vmatprep.subr.mxu0 0.0
    %1044 = vmatpush1.msra.mxu0 0.0
    %1045 = vmatprep.subr.mxu0 0.0
    %1046 = vmatpush1.msra.mxu0 0.0
    %1047 = vmatprep.subr.mxu0 0.0
    %1048 = vmatpush1.msra.mxu0 0.0
    %1049 = vmatprep.subr.mxu0 0.0
    %1050 = vmatpush1.msra.mxu0 0.0
    %1051 = vmatprep.subr.mxu0 0.0
    %1052 = vmatpush1.msra.mxu0 0.0
    %1053 = vmatprep.subr.mxu0 0.0
    %1054 = vmatpush1.msra.mxu0 0.0
    %1055 = vmatprep.mubr.f32.mxu0 0.0
    %1056 = vmatmul.mubr.f32.gmra.mrb[0].mxu0 %v989
    %v1057 = vpop.f32.mrb[0].mxu0
    %v1058 = vadd.f32 %v986, %v1057
    %v1059 = vpop.f32.mrb[0].mxu0
    %v1060 = vadd.f32 %v986, %v1059
    %1061 = vdwg.mxu0
    %1062 = vst [vmem:[#allocation7] sm:$0xff] %v1058
    %1063 = vst [vmem:[#allocation7 + $0x8] sm:$0xff] %v1060
    // Predicated region
    $region18: #{tpu_custom_call.1} parent=1 // pred_check
      _
    $region19: #{tpu_custom_call.1} parent=1 // pred_check_branch
      %1065 = sbr.rel (0) target = $region21
    $region20: #{tpu_custom_call.1} parent=1 // pred_region
      %s1067 = ssub.s32 256, 256
      %1068 = vsyncadd [#allocation4], %s1067
      %s1070 = sshll.u32 [#allocation7], 4
      %s1071 = int_to_ptr.vmem [resolvable:$true] %s1070
      %1073 = dma.vmem_to_hbm [thread:$0]  %s1071, 256, %s2, [#allocation4]
    $region21: #{tpu_custom_call.1} parent=1 // pred_fallthru
      _
    // Predicated region
    $region22: #{tpu_custom_call.1} parent=1 // pred_check
      _
    $region23: #{tpu_custom_call.1} parent=1 // pred_check_branch
      %1075 = sbr.rel (0) target = $region25
    $region24: #{tpu_custom_call.1} parent=1 // pred_region
      %1076 = dma.done [#allocation4], 256
    $region25: #{tpu_custom_call.1} parent=1 // pred_fallthru
      _
    %1077 = vsyncpa [#allocation3], 1
    %1078 = vsyncpa [#allocation6], 1
    %1079 = vsyncpa [#allocation4], 1

</llo_original>
